<compile_context>
chip_gen: v7x
topology: tpu7x:2x2x1
jax: 0.10.0
libtpu: 0.0.40
codegen_flags: <defaults>
</compile_context>

<pallas_src>
import math

import jax
import jax.numpy as jnp
from jax.experimental import pallas as pl
from jax.experimental.pallas import tpu as pltpu


_SMALL_BYPASS_BYTES = 512 * 1024      # below this, a plain XLA add beats a kernel launch
_TARGET_TILE_BYTES = 6 * 1024 * 1024  # per-tile target for x / out / signal tiles
_VMEM_LIMIT_BYTES = 48 << 20          # fits v7x's 64 MiB physical VMEM with headroom
_MIN_GRID_STEPS = 4                   # keep both v7x TensorCores fed


def _add_signal_kernel(x_ref, sig_ref, o_ref):
    # x_ref / o_ref: (tl, Cf) tile (batch dim squeezed out of the block).
    # sig_ref:       (tl, Cf) tile of the positional signal, VMEM-resident across B.
    o_ref[...] = x_ref[...] + sig_ref[...]


def _sinusoid_signal(length, channels, dtype):
    """(length, channels) sinusoidal signal matching thumt's PositionalEmbedding."""
    half_dim = channels // 2
    # PyTorch divides by (half_dim - 1); guard the degenerate half_dim <= 1 case
    # (PyTorch would divide by zero there). Documented divergence for channels <= 3.
    denom = float(half_dim - 1) if half_dim > 1 else 1.0
    scale = math.log(10000.0) / denom
    positions = jnp.arange(length, dtype=jnp.float32)
    inv_timescales = jnp.exp(jnp.arange(half_dim, dtype=jnp.float32) * (-scale))
    scaled_time = positions[:, None] * inv_timescales[None, :]       # (L, half_dim)
    signal = jnp.concatenate(
        [jnp.sin(scaled_time), jnp.cos(scaled_time)], axis=1)        # (L, 2*half_dim)
    if channels % 2 == 1:
        signal = jnp.concatenate(
            [signal, jnp.zeros((length, 1), dtype=jnp.float32)], axis=1)
    return signal.astype(dtype)


def _build_pallas_call(B, Lf, Cf, tl, dtype, itemsize, single_buffer_signal):
    n_l = -(-Lf // tl)
    grid = (n_l, B)  # B innermost -> the signal's block index is constant per inner loop

    if single_buffer_signal:
        # Signal only changes on the outer L axis: single-buffering reclaims a full
        # tile of VMEM for the pipelined x/out buffers.
        sig_spec = pl.BlockSpec((tl, Cf), lambda l, b: (l, 0),
                                pipeline_mode=pl.Buffered(1))
    else:
        sig_spec = pl.BlockSpec((tl, Cf), lambda l, b: (l, 0))

    # Advisory: one add per element, no transcendentals, read x + write out + read
    # the signal roughly once (it stays resident across the inner batch axis).
    cost = pl.CostEstimate(
        flops=B * Lf * Cf,
        transcendentals=0,
        bytes_accessed=(2 * B * Lf * Cf + Lf * Cf) * itemsize,
    )

    return pl.pallas_call(
        _add_signal_kernel,
        out_shape=jax.ShapeDtypeStruct((B, Lf, Cf), dtype),
        grid_spec=pltpu.PrefetchScalarGridSpec(
            num_scalar_prefetch=0,
            grid=grid,
            in_specs=[
                # x: one batch row (squeezed), tl rows of Lf, full Cf.
                pl.BlockSpec((None, tl, Cf), lambda l, b: (b, l, 0)),
                sig_spec,
            ],
            out_specs=pl.BlockSpec((None, tl, Cf), lambda l, b: (b, l, 0)),
        ),
        compiler_params=pltpu.CompilerParams(
            dimension_semantics=("parallel", "parallel"),
            vmem_limit_bytes=_VMEM_LIMIT_BYTES),
        cost_estimate=cost,
    )


def positional_embedding(inputs):
    """inputs: (B, L, C) -> (B, L, C) = inputs + sinusoidal positional signal."""
    if inputs.ndim != 3:
        raise ValueError("The rank of input must be 3.")
    B, L, C = inputs.shape
    itemsize = inputs.dtype.itemsize

    # Hoisted: compute the (L, C) signal once in plain JAX, already in input dtype.
    signal = _sinusoid_signal(L, C, inputs.dtype)

    # Small-problem bypass: kernel launch + per-step overhead dominates for tiny
    # inputs; XLA's fused broadcast-add is already at roofline.
    if B * L * C * itemsize < _SMALL_BYPASS_BYTES:
        return inputs + signal[None]

    # Generalized lane-density fold: fold rows of L into the channel dim so the last
    # block dim is a multiple of 128 (unmasked vst). fold == 1 when 128 | C.
    fold = 128 // math.gcd(C, 128)
    if L % fold != 0:
        fold = 1
    Lf, Cf = L // fold, C * fold
    x2 = inputs.reshape(B, Lf, Cf)
    sig2 = signal.reshape(Lf, Cf)

    # Row-tile size targeting ~6 MiB per tile; even with a double-buffered signal
    # (fallback path) the footprint is 6 tiles = 36 MiB, under the 48 MiB limit we
    # request and under v7x's 64 MiB physical VMEM.
    sublane = 8 * max(1, 4 // itemsize)          # 8 for f32, 16 for bf16, ...
    tl = max(1, _TARGET_TILE_BYTES // max(1, Cf * itemsize))
    tl = min(tl, Lf)

    # Keep at least ~_MIN_GRID_STEPS total grid steps so both v7x TensorCores have
    # work (v5e/v6e have a single TC and are unaffected by a smaller tile here).
    if B * (-(-Lf // tl)) < _MIN_GRID_STEPS and Lf > sublane:
        need_l_tiles = -(-_MIN_GRID_STEPS // B)
        tl = min(tl, -(-Lf // need_l_tiles))

    if tl < Lf:
        tl = max(sublane, (tl // sublane) * sublane)
        tl = min(tl, Lf)                          # never exceed the (folded) L extent

    try:
        out = _build_pallas_call(B, Lf, Cf, tl, inputs.dtype, itemsize,
                                 single_buffer_signal=True)(x2, sig2)
        out = jax.block_until_ready(out)
    except Exception:
        # pipeline_mode on a top-level pallas_call BlockSpec is not accepted by every
        # JAX version; fall back to default (double) buffering of the signal.
        out = _build_pallas_call(B, Lf, Cf, tl, inputs.dtype, itemsize,
                                 single_buffer_signal=False)(x2, sig2)
        out = jax.block_until_ready(out)

    return out.reshape(B, L, C)


def _reference(inputs):
    # Pure-JAX reference mirroring the PyTorch forward (independent of the kernel path).
    B, L, C = inputs.shape
    half_dim = C // 2
    denom = float(half_dim - 1) if half_dim > 1 else 1.0
    scale = math.log(10000.0) / denom
    positions = jnp.arange(L, dtype=jnp.float32)
    dimensions = jnp.exp(jnp.arange(half_dim, dtype=jnp.float32) * (-scale))
    scaled_time = positions[:, None] * dimensions[None, :]
    signal = jnp.concatenate([jnp.sin(scaled_time), jnp.cos(scaled_time)], axis=1)
    if C % 2 == 1:
        signal = jnp.concatenate(
            [signal, jnp.zeros((L, 1), dtype=jnp.float32)], axis=1)
    return inputs + signal.reshape(1, L, C).astype(inputs.dtype)


if __name__ == "__main__":
    key = jax.random.PRNGKey(0)
    k1, k2, k3 = jax.random.split(key, 3)

    # 1) Tiny shape implied by the module (batch=2, seq=8, hidden=32): bypass path.
    x_small = jax.random.normal(k1, (2, 8, 32), dtype=jnp.float32)
    out_small = jax.block_until_ready(positional_embedding(x_small))
    assert out_small.shape == x_small.shape and out_small.dtype == x_small.dtype
    assert jnp.allclose(out_small, _reference(x_small), atol=1e-5, rtol=1e-5)

    # 2) Shape large enough to exercise the Pallas kernel; C=320 exercises the
    #    generalized lane-density fold (Cf = 640, a multiple of 128), grid = (2, 2).
    x_mid = jax.random.normal(k2, (2, 384, 320), dtype=jnp.float32)
    out_mid = jax.block_until_ready(positional_embedding(x_mid))
    assert out_mid.shape == x_mid.shape and out_mid.dtype == x_mid.dtype
    assert jnp.allclose(out_mid, _reference(x_mid), atol=1e-5, rtol=1e-5)

    # 3) B == 1 path: the grid is still split along L (grid = (4, 1)) so both v7x
    #    TensorCores get work.
    x_b1 = jax.random.normal(k3, (1, 1024, 256), dtype=jnp.float32)
    out_b1 = jax.block_until_ready(positional_embedding(x_b1))
    assert out_b1.shape == x_b1.shape and out_b1.dtype == x_b1.dtype
    assert jnp.allclose(out_b1, _reference(x_b1), atol=1e-5, rtol=1e-5)

    print("KERNEL_OK")
</pallas_src>

<mosaic_0001>
module attributes {stable_mosaic.version = 11 : i64} {
  func.func @_add_signal_kernel(%arg0: i32, %arg1: i32, %arg2: memref<1x96x640xf32, #tpu.memory_space<vmem>>, %arg3: memref<96x640xf32, #tpu.memory_space<vmem>>, %arg4: memref<1x96x640xf32, #tpu.memory_space<vmem>>) attributes {dimension_semantics = [#tpu.dimension_semantics<parallel>, #tpu.dimension_semantics<parallel>], iteration_bounds = array<i64: 2, 2>, scalar_prefetch = 0 : i64, scratch_operands = 0 : i64, tpu.core_type = #tpu.core_type<tc>, window_params = [{transform_indices = @transform_0, window_bounds = array<i64: 1, 96, 640>}, {pipeline_mode = #tpu.pipeline_mode<synchronous>, transform_indices = @transform_1, window_bounds = array<i64: 96, 640>}, {transform_indices = @transform_2, window_bounds = array<i64: 1, 96, 640>}]} {
    %c0 = arith.constant 0 : index
    %c0_0 = arith.constant 0 : index
    %c0_1 = arith.constant 0 : index
    %0 = vector.load %arg2[%c0, %c0_0, %c0_1] : memref<1x96x640xf32, #tpu.memory_space<vmem>>, vector<1x96x640xf32>
    %1 = vector.shape_cast %0 : vector<1x96x640xf32> to vector<96x640xf32>
    %c0_2 = arith.constant 0 : index
    %c0_3 = arith.constant 0 : index
    %2 = vector.load %arg3[%c0_2, %c0_3] : memref<96x640xf32, #tpu.memory_space<vmem>>, vector<96x640xf32>
    %3 = arith.addf %1, %2 : vector<96x640xf32>
    %c0_4 = arith.constant 0 : index
    %c0_5 = arith.constant 0 : index
    %c0_6 = arith.constant 0 : index
    %4 = vector.load %arg4[%c0_4, %c0_5, %c0_6] : memref<1x96x640xf32, #tpu.memory_space<vmem>>, vector<1x96x640xf32>
    %5 = vector.shape_cast %4 : vector<1x96x640xf32> to vector<96x640xf32>
    %6 = vector.shape_cast %3 : vector<96x640xf32> to vector<1x96x640xf32>
    tpu.vector_store %arg4[%c0_4, %c0_5, %c0_6], %6 {strides = array<i32>} : memref<1x96x640xf32, #tpu.memory_space<vmem>>, vector<1x96x640xf32>,
    return
  }
  func.func @transform_0(%arg0: i32, %arg1: i32) -> (i32, i32, i32) {
    %c0_i32 = arith.constant 0 : i32
    %c0_i32_0 = arith.constant 0 : i32
    return %arg1, %arg0, %c0_i32 : i32, i32, i32
  }
  func.func @transform_1(%arg0: i32, %arg1: i32) -> (i32, i32) {
    %c0_i32 = arith.constant 0 : i32
    %c0_i32_0 = arith.constant 0 : i32
    return %arg0, %c0_i32 : i32, i32
  }
  func.func @transform_2(%arg0: i32, %arg1: i32) -> (i32, i32, i32) {
    %c0_i32 = arith.constant 0 : i32
    %c0_i32_0 = arith.constant 0 : i32
    return %arg1, %arg0, %c0_i32 : i32, i32, i32
  }
}

module attributes {stable_mosaic.version = 11 : i64} {
  func.func @_add_signal_kernel(%arg0: i32, %arg1: i32, %arg2: memref<1x96x640xf32, #tpu.memory_space<vmem>>, %arg3: memref<96x640xf32, #tpu.memory_space<vmem>>, %arg4: memref<1x96x640xf32, #tpu.memory_space<vmem>>) attributes {dimension_semantics = [#tpu.dimension_semantics<parallel>, #tpu.dimension_semantics<parallel>], iteration_bounds = array<i64: 2, 2>, scalar_prefetch = 0 : i64, scratch_operands = 0 : i64, tpu.core_type = #tpu.core_type<tc>, window_params = [{transform_indices = @transform_0, window_bounds = array<i64: 1, 96, 640>}, {transform_indices = @transform_1, window_bounds = array<i64: 96, 640>}, {transform_indices = @transform_2, window_bounds = array<i64: 1, 96, 640>}]} {
    %c0 = arith.constant 0 : index
    %c0_0 = arith.constant 0 : index
    %c0_1 = arith.constant 0 : index
    %0 = vector.load %arg2[%c0, %c0_0, %c0_1] : memref<1x96x640xf32, #tpu.memory_space<vmem>>, vector<1x96x640xf32>
    %1 = vector.shape_cast %0 : vector<1x96x640xf32> to vector<96x640xf32>
    %c0_2 = arith.constant 0 : index
    %c0_3 = arith.constant 0 : index
    %2 = vector.load %arg3[%c0_2, %c0_3] : memref<96x640xf32, #tpu.memory_space<vmem>>, vector<96x640xf32>
    %3 = arith.addf %1, %2 : vector<96x640xf32>
    %c0_4 = arith.constant 0 : index
    %c0_5 = arith.constant 0 : index
    %c0_6 = arith.constant 0 : index
    %4 = vector.load %arg4[%c0_4, %c0_5, %c0_6] : memref<1x96x640xf32, #tpu.memory_space<vmem>>, vector<1x96x640xf32>
    %5 = vector.shape_cast %4 : vector<1x96x640xf32> to vector<96x640xf32>
    %6 = vector.shape_cast %3 : vector<96x640xf32> to vector<1x96x640xf32>
    tpu.vector_store %arg4[%c0_4, %c0_5, %c0_6], %6 {strides = array<i32>} : memref<1x96x640xf32, #tpu.memory_space<vmem>>, vector<1x96x640xf32>,
    return
  }
  func.func @transform_0(%arg0: i32, %arg1: i32) -> (i32, i32, i32) {
    %c0_i32 = arith.constant 0 : i32
    %c0_i32_0 = arith.constant 0 : i32
    return %arg1, %arg0, %c0_i32 : i32, i32, i32
  }
  func.func @transform_1(%arg0: i32, %arg1: i32) -> (i32, i32) {
    %c0_i32 = arith.constant 0 : i32
    %c0_i32_0 = arith.constant 0 : i32
    return %arg0, %c0_i32 : i32, i32
  }
  func.func @transform_2(%arg0: i32, %arg1: i32) -> (i32, i32, i32) {
    %c0_i32 = arith.constant 0 : i32
    %c0_i32_0 = arith.constant 0 : i32
    return %arg1, %arg0, %c0_i32 : i32, i32, i32
  }
}

</mosaic_0001>

<llo_original>
// kernel: tpu_custom_call.1
$region0: #{tpu_custom_call.1}
  #allocation0 [shape = 'u32[]', space=smem, size = 0x4, offset = 0x4, fixed_abs, tag = 'smem constant byte address 0x4 - core index']
  #allocation1 [shape = 'u32[144,128]{1,0:T(1,128)}', space=vmem, size = 0x12000, scoped, tag = 'internal scratch']
  %s0 = inlined_call_operand.hbm [shape: f32[2,192,640], index: 0, kind: input, shape index: {}]
  %s1 = inlined_call_operand.hbm [shape: f32[192,640], index: 1, kind: input, shape index: {}]
  %s2 = inlined_call_operand.hbm [shape: f32[2,192,640], index: 2, kind: output, shape index: {}]
  %s3 = sld [smem:[#allocation0]]
  $region49: #{tpu_custom_call.1} parent=0
    _
  %s5 = ssub.s32 1, %s3
  %s6 = scalar_select 0, %s5, %s3
  $region1: #{tpu_custom_call.1} parent=0
    #allocation2 [shape = 'u8[491520]{0}', space=vmem, size = 0x78000, scoped, tag = 'input window, operand 0']
    #allocation3 [shape = 's32[2]{0}', space=sflag, size = 0x8, scoped, tag = 'scoped memory for tpu_custom_call.1']
    #allocation4 [shape = 's32[2]{0}', space=sflag, size = 0x8, scoped, tag = 'scoped memory for tpu_custom_call.1']
    #allocation5 [shape = 'u8[245760]{0}', space=vmem, size = 0x3c000, scoped, tag = 'input window, operand 1, single buffered']
    #allocation6 [shape = 's32[1]{0}', space=sflag, size = 0x4, scoped, tag = 'scoped memory for tpu_custom_call.1']
    #allocation7 [shape = 'u8[491520]{0}', space=vmem, size = 0x78000, scoped, tag = 'output window, operand 0']
    %7 = vsyncpa [#allocation3], 0
    %s8 = scalar_lea.sflag [#allocation3], 1
    %9 = vsyncpa %s8, 0
    %10 = vsyncpa [#allocation6], 0
    %11 = vsyncpa [#allocation4], 0
    %s12 = scalar_lea.sflag [#allocation4], 1
    %13 = vsyncpa %s12, 0
    loop: start=0, step=1, limit=6
    $region2: #{tpu_custom_call.1} parent=1 // loop_pre_header
      _
    $region3: #{tpu_custom_call.1} parent=1 // loop_header
      %s15 = sphi 0, %s19
      %p16 = scmp.ge.s32.totalorder %s15, 6
      %s22 = sphi 0, %s34
      %s23 = sphi 0, %s30
      %s24 = sphi 0, %s22
      %s25 = sphi 0, %s23
      %s26 = sphi 0, %s24
      %s27 = sphi 0, %s25
      %s39 = sphi 0, %s41
      %s42 = sphi 0, %s39
      %s43 = sphi 0, %s42
      %s59 = sphi 0, %s43
      %s65 = sphi 0, %s67
      %s68 = sphi 0, %s65
      %s69 = sphi 0, %s68
      %s85 = sphi 0, %s69
      %s93 = sphi 0, %s95
      %s96 = sphi 0, %s93
      %s97 = sphi 0, %s96
      %s113 = sphi 0, %s97
    $region4: #{tpu_custom_call.1} parent=1 // loop_header_branch
      %18 = sbr.rel (%p16) target = $region8
    $region5: #{tpu_custom_call.1} parent=1 // loop_body
      %s20 = ssub.s32 %s15, 1
      %s21 = ssub.s32 %s15, 2
      %s28 = sadd.s32 1, %s23
      %p29 = scmp.ge.s32.totalorder %s28, 2
      %s30 = scalar_select %p29, 0, %s28
      %s31 = sadd.s32 1, %s22
      %s32 = scalar_select %p29, %s31, %s22
      %p33 = scmp.ge.s32.totalorder %s32, 2
      %s34 = scalar_select %p33, 0, %s32
      %s35 = ssub.s32 %s23, %s30
      %s36 = ssub.s32 %s22, %s34
      %s37 = sor.u32 %s35, %s36
      %p38 = scmp.eq.s32.totalorder %s37, 0
      %s40 = sadd.s32 %s39, 1
      %s41 = scalar_select %p38, %s39, %s40
      %p44 = pneg %p38
      %p45 = scmp.eq.s32.totalorder %s15, 3
      %p46 = por %p44, %p45
      %p47 = scmp.ne.s32.totalorder %s39, %s42
      %p48 = scmp.eq.s32.totalorder %s15, 0
      %p49 = por %p47, %p48
      %p50 = scmp.ne.s32.totalorder %s39, %s42
      %p51 = scmp.eq.s32.totalorder %s20, 3
      %p52 = por %p50, %p51
      %p53 = scmp.ne.s32.totalorder %s42, %s43
      %p54 = scmp.eq.s32.totalorder %s20, 0
      %p55 = por %p53, %p54
      %p56 = scmp.ne.s32.totalorder %s42, %s43
      %p57 = scmp.eq.s32.totalorder %s21, 3
      %p58 = por %p56, %p57
      %p60 = scmp.ne.s32.totalorder %s43, %s59
      %p61 = scmp.eq.s32.totalorder %s21, 0
      %p62 = por %p60, %p61
      %s63 = ssub.s32 %s22, %s34
      %p64 = scmp.eq.s32.totalorder %s63, 0
      %s66 = sadd.s32 %s65, 1
      %s67 = scalar_select %p64, %s65, %s66
      %p70 = pneg %p64
      %p71 = scmp.eq.s32.totalorder %s15, 3
      %p72 = por %p70, %p71
      %p73 = scmp.ne.s32.totalorder %s65, %s68
      %p74 = scmp.eq.s32.totalorder %s15, 0
      %p75 = por %p73, %p74
      %p76 = scmp.ne.s32.totalorder %s65, %s68
      %p77 = scmp.eq.s32.totalorder %s20, 3
      %p78 = por %p76, %p77
      %p79 = scmp.ne.s32.totalorder %s68, %s69
      %p80 = scmp.eq.s32.totalorder %s20, 0
      %p81 = por %p79, %p80
      %p82 = scmp.ne.s32.totalorder %s68, %s69
      %p83 = scmp.eq.s32.totalorder %s21, 3
      %p84 = por %p82, %p83
      %p86 = scmp.ne.s32.totalorder %s69, %s85
      %p87 = scmp.eq.s32.totalorder %s21, 0
      %p88 = por %p86, %p87
      %s89 = ssub.s32 %s23, %s30
      %s90 = ssub.s32 %s22, %s34
      %s91 = sor.u32 %s89, %s90
      %p92 = scmp.eq.s32.totalorder %s91, 0
      %s94 = sadd.s32 %s93, 1
      %s95 = scalar_select %p92, %s93, %s94
      %p98 = pneg %p92
      %p99 = scmp.eq.s32.totalorder %s15, 3
      %p100 = por %p98, %p99
      %p101 = scmp.ne.s32.totalorder %s93, %s96
      %p102 = scmp.eq.s32.totalorder %s15, 0
      %p103 = por %p101, %p102
      %p104 = scmp.ne.s32.totalorder %s93, %s96
      %p105 = scmp.eq.s32.totalorder %s20, 3
      %p106 = por %p104, %p105
      %p107 = scmp.ne.s32.totalorder %s96, %s97
      %p108 = scmp.eq.s32.totalorder %s20, 0
      %p109 = por %p107, %p108
      %p110 = scmp.ne.s32.totalorder %s96, %s97
      %p111 = scmp.eq.s32.totalorder %s21, 3
      %p112 = por %p110, %p111
      %p114 = scmp.ne.s32.totalorder %s97, %s113
      %p115 = scmp.eq.s32.totalorder %s21, 0
      %p116 = por %p114, %p115
      %p117 = scmp.le.s32.totalorder 1, %s15
      %p118 = scmp.lt.s32.totalorder %s15, 5
      %p119 = pnand %p117, %p118
      %p120 = pneg %p119
      // Predicated region
      $region9: #{tpu_custom_call.1} parent=5 // pred_check
        _
      $region10: #{tpu_custom_call.1} parent=5 // pred_check_branch
        %122 = sbr.rel (%p119) target = $region12
      $region11: #{tpu_custom_call.1} parent=5 // pred_region
        %s123 = ssub.s32 %s15, 1
        // Predicated region
        $region13: #{tpu_custom_call.1} parent=11 // pred_check
          %p124 = pneg %p81
        $region14: #{tpu_custom_call.1} parent=11 // pred_check_branch
          %126 = sbr.rel (%p124) target = $region16
        $region15: #{tpu_custom_call.1} parent=11 // pred_region
          %s127 = smul.u32 12, %s24
          %s129 = ssub.s32 7680, 7680
          %130 = vsyncadd [#allocation6], %s129
          %s131 = smul.addr %s127, 5
          %s132 = smul.addr %s131, 128
          %s133 = scalar_lea.hbm %s1, %s132
          %s134 = sshll.u32 [#allocation5], 4
          %s135 = int_to_ptr.vmem [resolvable:$true] %s134
          %140 = dma.hbm_to_vmem [thread:$0]  %s133, 7680, %s135, [#allocation6], 640, 640, 40
        $region16: #{tpu_custom_call.1} parent=11 // pred_fallthru
          _
      $region12: #{tpu_custom_call.1} parent=5 // pred_fallthru
        _
      %p141 = scmp.lt.s32.totalorder %s15, 4
      // Predicated region
      $region17: #{tpu_custom_call.1} parent=5 // pred_check
        %p142 = pneg %p141
      $region18: #{tpu_custom_call.1} parent=5 // pred_check_branch
        %144 = sbr.rel (%p142) target = $region20
      $region19: #{tpu_custom_call.1} parent=5 // pred_region
        // Predicated region
        $region21: #{tpu_custom_call.1} parent=19 // pred_check
          %p145 = pneg %p49
        $region22: #{tpu_custom_call.1} parent=19 // pred_check_branch
          %147 = sbr.rel (%p145) target = $region24
        $region23: #{tpu_custom_call.1} parent=19 // pred_region
          %s148 = sand.u32 %s39, 1
          %s149 = scalar_lea.sflag [#allocation3], %s148
          %s150 = sand.u32 %s39, 1
          %s151 = smul.addr %s150, 480
          %s152 = scalar_lea.vmem [#allocation2], %s151
          %s153 = smul.u32 12, %s22
          %s155 = ssub.s32 7680, 7680
          %156 = vsyncadd %s149, %s155
          %s157 = smul.addr %s153, 5
          %s158 = smul.addr %s23, 120
          %s159 = sadd.s32 %s157, %s158
          %s160 = smul.addr %s159, 128
          %s161 = scalar_lea.hbm %s0, %s160
          %s162 = sshll.u32 %s152, 4
          %s163 = int_to_ptr.vmem [resolvable:$true] %s162
          %168 = dma.hbm_to_vmem [thread:$0]  %s161, 7680, %s163, %s149, 640, 640, 40
        $region24: #{tpu_custom_call.1} parent=19 // pred_fallthru
          _
      $region20: #{tpu_custom_call.1} parent=5 // pred_fallthru
        _
      %p169 = scmp.le.s32.totalorder 1, %s15
      %p170 = scmp.lt.s32.totalorder %s15, 5
      %p171 = pnand %p169, %p170
      %p172 = pneg %p171
      // Predicated region
      $region25: #{tpu_custom_call.1} parent=5 // pred_check
        _
      $region26: #{tpu_custom_call.1} parent=5 // pred_check_branch
        %174 = sbr.rel (%p171) target = $region28
      $region27: #{tpu_custom_call.1} parent=5 // pred_region
        %s175 = ssub.s32 %s15, 1
        %s176 = sand.u32 %s42, 1
        %s177 = scalar_lea.sflag [#allocation3], %s176
        %s178 = sand.u32 %s42, 1
        %s179 = smul.addr %s178, 480
        %s180 = scalar_lea.vmem [#allocation2], %s179
        // Predicated region
        $region29: #{tpu_custom_call.1} parent=27 // pred_check
          %p181 = pneg %p55
        $region30: #{tpu_custom_call.1} parent=27 // pred_check_branch
          %183 = sbr.rel (%p181) target = $region32
        $region31: #{tpu_custom_call.1} parent=27 // pred_region
          %184 = dma.done %s177, 7680
        $region32: #{tpu_custom_call.1} parent=27 // pred_fallthru
          _
        // Predicated region
        $region33: #{tpu_custom_call.1} parent=27 // pred_check
          %p185 = pneg %p81
        $region34: #{tpu_custom_call.1} parent=27 // pred_check_branch
          %187 = sbr.rel (%p185) target = $region36
        $region35: #{tpu_custom_call.1} parent=27 // pred_region
          %188 = dma.done [#allocation6], 7680
        $region36: #{tpu_custom_call.1} parent=27 // pred_fallthru
          _
        %s189 = sand.u32 %s42, 1
        %s190 = scalar_lea.sflag [#allocation3], %s189
        %s191 = sand.u32 %s42, 1
        %s192 = smul.addr %s191, 480
        %s193 = scalar_lea.vmem [#allocation2], %s192
        %p194 = pneg %p55
        %p195 = pneg %p52
        %p196 = pneg %p81
        %p197 = pneg %p78
        %p198 = pneg %p109
        %p199 = pneg %p106
        %s200 = sand.u32 %s96, 1
        %s201 = scalar_lea.sflag [#allocation4], %s200
        %s202 = sand.u32 %s96, 1
        %s203 = smul.addr %s202, 480
        %s204 = scalar_lea.vmem [#allocation7], %s203
        %s205 = smul.u32 12, %s24
        %s206 = smul.u32 12, %s24
        %s207 = smul.u32 12, %s24
        %v208 = vld [vmem:[%s180] sm:$0xff]
        %v209 = vld [vmem:[%s180 + $0x8] sm:$0xff]
        %v210 = vld [vmem:[%s180 + $0x10] sm:$0xff]
        %v211 = vld [vmem:[%s180 + $0x18] sm:$0xff]
        %v212 = vld [vmem:[%s180 + $0x20] sm:$0xff]
        %v213 = vld [vmem:[%s180 + $0x28] sm:$0xff]
        %v214 = vld [vmem:[%s180 + $0x30] sm:$0xff]
        %v215 = vld [vmem:[%s180 + $0x38] sm:$0xff]
        %v216 = vld [vmem:[%s180 + $0x40] sm:$0xff]
        %v217 = vld [vmem:[%s180 + $0x48] sm:$0xff]
        %v218 = vld [vmem:[%s180 + $0x50] sm:$0xff]
        %v219 = vld [vmem:[%s180 + $0x58] sm:$0xff]
        %v220 = vld [vmem:[%s180 + $0x60] sm:$0xff]
        %v221 = vld [vmem:[%s180 + $0x68] sm:$0xff]
        %v222 = vld [vmem:[%s180 + $0x70] sm:$0xff]
        %v223 = vld [vmem:[%s180 + $0x78] sm:$0xff]
        %v224 = vld [vmem:[%s180 + $0x80] sm:$0xff]
        %v225 = vld [vmem:[%s180 + $0x88] sm:$0xff]
        %v226 = vld [vmem:[%s180 + $0x90] sm:$0xff]
        %v227 = vld [vmem:[%s180 + $0x98] sm:$0xff]
        %v228 = vld [vmem:[%s180 + $0xa0] sm:$0xff]
        %v229 = vld [vmem:[%s180 + $0xa8] sm:$0xff]
        %v230 = vld [vmem:[%s180 + $0xb0] sm:$0xff]
        %v231 = vld [vmem:[%s180 + $0xb8] sm:$0xff]
        %v232 = vld [vmem:[%s180 + $0xc0] sm:$0xff]
        %v233 = vld [vmem:[%s180 + $0xc8] sm:$0xff]
        %v234 = vld [vmem:[%s180 + $0xd0] sm:$0xff]
        %v235 = vld [vmem:[%s180 + $0xd8] sm:$0xff]
        %v236 = vld [vmem:[%s180 + $0xe0] sm:$0xff]
        %v237 = vld [vmem:[%s180 + $0xe8] sm:$0xff]
        %v238 = vld [vmem:[%s180 + $0xf0] sm:$0xff]
        %v239 = vld [vmem:[%s180 + $0xf8] sm:$0xff]
        %v240 = vld [vmem:[%s180 + $0x100] sm:$0xff]
        %v241 = vld [vmem:[%s180 + $0x108] sm:$0xff]
        %v242 = vld [vmem:[%s180 + $0x110] sm:$0xff]
        %v243 = vld [vmem:[%s180 + $0x118] sm:$0xff]
        %v244 = vld [vmem:[%s180 + $0x120] sm:$0xff]
        %v245 = vld [vmem:[%s180 + $0x128] sm:$0xff]
        %v246 = vld [vmem:[%s180 + $0x130] sm:$0xff]
        %v247 = vld [vmem:[%s180 + $0x138] sm:$0xff]
        %v248 = vld [vmem:[%s180 + $0x140] sm:$0xff]
        %v249 = vld [vmem:[%s180 + $0x148] sm:$0xff]
        %v250 = vld [vmem:[%s180 + $0x150] sm:$0xff]
        %v251 = vld [vmem:[%s180 + $0x158] sm:$0xff]
        %v252 = vld [vmem:[%s180 + $0x160] sm:$0xff]
        %v253 = vld [vmem:[%s180 + $0x168] sm:$0xff]
        %v254 = vld [vmem:[%s180 + $0x170] sm:$0xff]
        %v255 = vld [vmem:[%s180 + $0x178] sm:$0xff]
        %v256 = vld [vmem:[%s180 + $0x180] sm:$0xff]
        %v257 = vld [vmem:[%s180 + $0x188] sm:$0xff]
        %v258 = vld [vmem:[%s180 + $0x190] sm:$0xff]
        %v259 = vld [vmem:[%s180 + $0x198] sm:$0xff]
        %v260 = vld [vmem:[%s180 + $0x1a0] sm:$0xff]
        %v261 = vld [vmem:[%s180 + $0x1a8] sm:$0xff]
        %v262 = vld [vmem:[%s180 + $0x1b0] sm:$0xff]
        %v263 = vld [vmem:[%s180 + $0x1b8] sm:$0xff]
        %v264 = vld [vmem:[%s180 + $0x1c0] sm:$0xff]
        %v265 = vld [vmem:[%s180 + $0x1c8] sm:$0xff]
        %v266 = vld [vmem:[%s180 + $0x1d0] sm:$0xff]
        %v267 = vld [vmem:[%s180 + $0x1d8] sm:$0xff]
        %v268 = vld [vmem:[#allocation5] sm:$0xff]
        %v269 = vld [vmem:[#allocation5 + $0x8] sm:$0xff]
        %v270 = vld [vmem:[#allocation5 + $0x10] sm:$0xff]
        %v271 = vld [vmem:[#allocation5 + $0x18] sm:$0xff]
        %v272 = vld [vmem:[#allocation5 + $0x20] sm:$0xff]
        %v273 = vld [vmem:[#allocation5 + $0x28] sm:$0xff]
        %v274 = vld [vmem:[#allocation5 + $0x30] sm:$0xff]
        %v275 = vld [vmem:[#allocation5 + $0x38] sm:$0xff]
        %v276 = vld [vmem:[#allocation5 + $0x40] sm:$0xff]
        %v277 = vld [vmem:[#allocation5 + $0x48] sm:$0xff]
        %v278 = vld [vmem:[#allocation5 + $0x50] sm:$0xff]
        %v279 = vld [vmem:[#allocation5 + $0x58] sm:$0xff]
        %v280 = vld [vmem:[#allocation5 + $0x60] sm:$0xff]
        %v281 = vld [vmem:[#allocation5 + $0x68] sm:$0xff]
        %v282 = vld [vmem:[#allocation5 + $0x70] sm:$0xff]
        %v283 = vld [vmem:[#allocation5 + $0x78] sm:$0xff]
        %v284 = vld [vmem:[#allocation5 + $0x80] sm:$0xff]
        %v285 = vld [vmem:[#allocation5 + $0x88] sm:$0xff]
        %v286 = vld [vmem:[#allocation5 + $0x90] sm:$0xff]
        %v287 = vld [vmem:[#allocation5 + $0x98] sm:$0xff]
        %v288 = vld [vmem:[#allocation5 + $0xa0] sm:$0xff]
        %v289 = vld [vmem:[#allocation5 + $0xa8] sm:$0xff]
        %v290 = vld [vmem:[#allocation5 + $0xb0] sm:$0xff]
        %v291 = vld [vmem:[#allocation5 + $0xb8] sm:$0xff]
        %v292 = vld [vmem:[#allocation5 + $0xc0] sm:$0xff]
        %v293 = vld [vmem:[#allocation5 + $0xc8] sm:$0xff]
        %v294 = vld [vmem:[#allocation5 + $0xd0] sm:$0xff]
        %v295 = vld [vmem:[#allocation5 + $0xd8] sm:$0xff]
        %v296 = vld [vmem:[#allocation5 + $0xe0] sm:$0xff]
        %v297 = vld [vmem:[#allocation5 + $0xe8] sm:$0xff]
        %v298 = vld [vmem:[#allocation5 + $0xf0] sm:$0xff]
        %v299 = vld [vmem:[#allocation5 + $0xf8] sm:$0xff]
        %v300 = vld [vmem:[#allocation5 + $0x100] sm:$0xff]
        %v301 = vld [vmem:[#allocation5 + $0x108] sm:$0xff]
        %v302 = vld [vmem:[#allocation5 + $0x110] sm:$0xff]
        %v303 = vld [vmem:[#allocation5 + $0x118] sm:$0xff]
        %v304 = vld [vmem:[#allocation5 + $0x120] sm:$0xff]
        %v305 = vld [vmem:[#allocation5 + $0x128] sm:$0xff]
        %v306 = vld [vmem:[#allocation5 + $0x130] sm:$0xff]
        %v307 = vld [vmem:[#allocation5 + $0x138] sm:$0xff]
        %v308 = vld [vmem:[#allocation5 + $0x140] sm:$0xff]
        %v309 = vld [vmem:[#allocation5 + $0x148] sm:$0xff]
        %v310 = vld [vmem:[#allocation5 + $0x150] sm:$0xff]
        %v311 = vld [vmem:[#allocation5 + $0x158] sm:$0xff]
        %v312 = vld [vmem:[#allocation5 + $0x160] sm:$0xff]
        %v313 = vld [vmem:[#allocation5 + $0x168] sm:$0xff]
        %v314 = vld [vmem:[#allocation5 + $0x170] sm:$0xff]
        %v315 = vld [vmem:[#allocation5 + $0x178] sm:$0xff]
        %v316 = vld [vmem:[#allocation5 + $0x180] sm:$0xff]
        %v317 = vld [vmem:[#allocation5 + $0x188] sm:$0xff]
        %v318 = vld [vmem:[#allocation5 + $0x190] sm:$0xff]
        %v319 = vld [vmem:[#allocation5 + $0x198] sm:$0xff]
        %v320 = vld [vmem:[#allocation5 + $0x1a0] sm:$0xff]
        %v321 = vld [vmem:[#allocation5 + $0x1a8] sm:$0xff]
        %v322 = vld [vmem:[#allocation5 + $0x1b0] sm:$0xff]
        %v323 = vld [vmem:[#allocation5 + $0x1b8] sm:$0xff]
        %v324 = vld [vmem:[#allocation5 + $0x1c0] sm:$0xff]
        %v325 = vld [vmem:[#allocation5 + $0x1c8] sm:$0xff]
        %v326 = vld [vmem:[#allocation5 + $0x1d0] sm:$0xff]
        %v327 = vld [vmem:[#allocation5 + $0x1d8] sm:$0xff]
        %v328 = vadd.f32 %v208, %v268
        %v329 = vadd.f32 %v209, %v269
        %v330 = vadd.f32 %v210, %v270
        %v331 = vadd.f32 %v211, %v271
        %v332 = vadd.f32 %v212, %v272
        %v333 = vadd.f32 %v213, %v273
        %v334 = vadd.f32 %v214, %v274
        %v335 = vadd.f32 %v215, %v275
        %v336 = vadd.f32 %v216, %v276
        %v337 = vadd.f32 %v217, %v277
        %v338 = vadd.f32 %v218, %v278
        %v339 = vadd.f32 %v219, %v279
        %v340 = vadd.f32 %v220, %v280
        %v341 = vadd.f32 %v221, %v281
        %v342 = vadd.f32 %v222, %v282
        %v343 = vadd.f32 %v223, %v283
        %v344 = vadd.f32 %v224, %v284
        %v345 = vadd.f32 %v225, %v285
        %v346 = vadd.f32 %v226, %v286
        %v347 = vadd.f32 %v227, %v287
        %v348 = vadd.f32 %v228, %v288
        %v349 = vadd.f32 %v229, %v289
        %v350 = vadd.f32 %v230, %v290
        %v351 = vadd.f32 %v231, %v291
        %v352 = vadd.f32 %v232, %v292
        %v353 = vadd.f32 %v233, %v293
        %v354 = vadd.f32 %v234, %v294
        %v355 = vadd.f32 %v235, %v295
        %v356 = vadd.f32 %v236, %v296
        %v357 = vadd.f32 %v237, %v297
        %v358 = vadd.f32 %v238, %v298
        %v359 = vadd.f32 %v239, %v299
        %v360 = vadd.f32 %v240, %v300
        %v361 = vadd.f32 %v241, %v301
        %v362 = vadd.f32 %v242, %v302
        %v363 = vadd.f32 %v243, %v303
        %v364 = vadd.f32 %v244, %v304
        %v365 = vadd.f32 %v245, %v305
        %v366 = vadd.f32 %v246, %v306
        %v367 = vadd.f32 %v247, %v307
        %v368 = vadd.f32 %v248, %v308
        %v369 = vadd.f32 %v249, %v309
        %v370 = vadd.f32 %v250, %v310
        %v371 = vadd.f32 %v251, %v311
        %v372 = vadd.f32 %v252, %v312
        %v373 = vadd.f32 %v253, %v313
        %v374 = vadd.f32 %v254, %v314
        %v375 = vadd.f32 %v255, %v315
        %v376 = vadd.f32 %v256, %v316
        %v377 = vadd.f32 %v257, %v317
        %v378 = vadd.f32 %v258, %v318
        %v379 = vadd.f32 %v259, %v319
        %v380 = vadd.f32 %v260, %v320
        %v381 = vadd.f32 %v261, %v321
        %v382 = vadd.f32 %v262, %v322
        %v383 = vadd.f32 %v263, %v323
        %v384 = vadd.f32 %v264, %v324
        %v385 = vadd.f32 %v265, %v325
        %v386 = vadd.f32 %v266, %v326
        %v387 = vadd.f32 %v267, %v327
        %388 = vst [vmem:[%s204] sm:$0xff] %v328
        %389 = vst [vmem:[%s204 + $0x8] sm:$0xff] %v329
        %390 = vst [vmem:[%s204 + $0x10] sm:$0xff] %v330
        %391 = vst [vmem:[%s204 + $0x18] sm:$0xff] %v331
        %392 = vst [vmem:[%s204 + $0x20] sm:$0xff] %v332
        %393 = vst [vmem:[%s204 + $0x28] sm:$0xff] %v333
        %394 = vst [vmem:[%s204 + $0x30] sm:$0xff] %v334
        %395 = vst [vmem:[%s204 + $0x38] sm:$0xff] %v335
        %396 = vst [vmem:[%s204 + $0x40] sm:$0xff] %v336
        %397 = vst [vmem:[%s204 + $0x48] sm:$0xff] %v337
        %398 = vst [vmem:[%s204 + $0x50] sm:$0xff] %v338
        %399 = vst [vmem:[%s204 + $0x58] sm:$0xff] %v339
        %400 = vst [vmem:[%s204 + $0x60] sm:$0xff] %v340
        %401 = vst [vmem:[%s204 + $0x68] sm:$0xff] %v341
        %402 = vst [vmem:[%s204 + $0x70] sm:$0xff] %v342
        %403 = vst [vmem:[%s204 + $0x78] sm:$0xff] %v343
        %404 = vst [vmem:[%s204 + $0x80] sm:$0xff] %v344
        %405 = vst [vmem:[%s204 + $0x88] sm:$0xff] %v345
        %406 = vst [vmem:[%s204 + $0x90] sm:$0xff] %v346
        %407 = vst [vmem:[%s204 + $0x98] sm:$0xff] %v347
        %408 = vst [vmem:[%s204 + $0xa0] sm:$0xff] %v348
        %409 = vst [vmem:[%s204 + $0xa8] sm:$0xff] %v349
        %410 = vst [vmem:[%s204 + $0xb0] sm:$0xff] %v350
        %411 = vst [vmem:[%s204 + $0xb8] sm:$0xff] %v351
        %412 = vst [vmem:[%s204 + $0xc0] sm:$0xff] %v352
        %413 = vst [vmem:[%s204 + $0xc8] sm:$0xff] %v353
        %414 = vst [vmem:[%s204 + $0xd0] sm:$0xff] %v354
        %415 = vst [vmem:[%s204 + $0xd8] sm:$0xff] %v355
        %416 = vst [vmem:[%s204 + $0xe0] sm:$0xff] %v356
        %417 = vst [vmem:[%s204 + $0xe8] sm:$0xff] %v357
        %418 = vst [vmem:[%s204 + $0xf0] sm:$0xff] %v358
        %419 = vst [vmem:[%s204 + $0xf8] sm:$0xff] %v359
        %420 = vst [vmem:[%s204 + $0x100] sm:$0xff] %v360
        %421 = vst [vmem:[%s204 + $0x108] sm:$0xff] %v361
        %422 = vst [vmem:[%s204 + $0x110] sm:$0xff] %v362
        %423 = vst [vmem:[%s204 + $0x118] sm:$0xff] %v363
        %424 = vst [vmem:[%s204 + $0x120] sm:$0xff] %v364
        %425 = vst [vmem:[%s204 + $0x128] sm:$0xff] %v365
        %426 = vst [vmem:[%s204 + $0x130] sm:$0xff] %v366
        %427 = vst [vmem:[%s204 + $0x138] sm:$0xff] %v367
        %428 = vst [vmem:[%s204 + $0x140] sm:$0xff] %v368
        %429 = vst [vmem:[%s204 + $0x148] sm:$0xff] %v369
        %430 = vst [vmem:[%s204 + $0x150] sm:$0xff] %v370
        %431 = vst [vmem:[%s204 + $0x158] sm:$0xff] %v371
        %432 = vst [vmem:[%s204 + $0x160] sm:$0xff] %v372
        %433 = vst [vmem:[%s204 + $0x168] sm:$0xff] %v373
        %434 = vst [vmem:[%s204 + $0x170] sm:$0xff] %v374
        %435 = vst [vmem:[%s204 + $0x178] sm:$0xff] %v375
        %436 = vst [vmem:[%s204 + $0x180] sm:$0xff] %v376
        %437 = vst [vmem:[%s204 + $0x188] sm:$0xff] %v377
        %438 = vst [vmem:[%s204 + $0x190] sm:$0xff] %v378
        %439 = vst [vmem:[%s204 + $0x198] sm:$0xff] %v379
        %440 = vst [vmem:[%s204 + $0x1a0] sm:$0xff] %v380
        %441 = vst [vmem:[%s204 + $0x1a8] sm:$0xff] %v381
        %442 = vst [vmem:[%s204 + $0x1b0] sm:$0xff] %v382
        %443 = vst [vmem:[%s204 + $0x1b8] sm:$0xff] %v383
        %444 = vst [vmem:[%s204 + $0x1c0] sm:$0xff] %v384
        %445 = vst [vmem:[%s204 + $0x1c8] sm:$0xff] %v385
        %446 = vst [vmem:[%s204 + $0x1d0] sm:$0xff] %v386
        %447 = vst [vmem:[%s204 + $0x1d8] sm:$0xff] %v387
        %s448 = sand.u32 %s96, 1
        %s449 = scalar_lea.sflag [#allocation4], %s448
        %s450 = sand.u32 %s96, 1
        %s451 = smul.addr %s450, 480
        %s452 = scalar_lea.vmem [#allocation7], %s451
        // Predicated region
        $region37: #{tpu_custom_call.1} parent=27 // pred_check
          %p453 = pneg %p106
        $region38: #{tpu_custom_call.1} parent=27 // pred_check_branch
          %455 = sbr.rel (%p453) target = $region40
        $region39: #{tpu_custom_call.1} parent=27 // pred_region
          %s456 = smul.u32 12, %s24
          %s458 = ssub.s32 7680, 7680
          %459 = vsyncadd %s449, %s458
          %s460 = smul.addr %s456, 5
          %s461 = smul.addr %s25, 120
          %s462 = sadd.s32 %s460, %s461
          %s463 = smul.addr %s462, 128
          %s464 = scalar_lea.hbm %s2, %s463
          %s465 = sshll.u32 %s452, 4
          %s466 = int_to_ptr.vmem [resolvable:$true] %s465
          %471 = dma.vmem_to_hbm [thread:$0]  %s466, 7680, %s464, %s449, 640, 640, 40
        $region40: #{tpu_custom_call.1} parent=27 // pred_fallthru
          _
      $region28: #{tpu_custom_call.1} parent=5 // pred_fallthru
        _
      %p472 = scmp.le.s32.totalorder 2, %s15
      // Predicated region
      $region41: #{tpu_custom_call.1} parent=5 // pred_check
        %p473 = pneg %p472
      $region42: #{tpu_custom_call.1} parent=5 // pred_check_branch
        %475 = sbr.rel (%p473) target = $region44
      $region43: #{tpu_custom_call.1} parent=5 // pred_region
        %s476 = ssub.s32 %s15, 2
        // Predicated region
        $region45: #{tpu_custom_call.1} parent=43 // pred_check
          %p477 = pneg %p112
        $region46: #{tpu_custom_call.1} parent=43 // pred_check_branch
          %479 = sbr.rel (%p477) target = $region48
        $region47: #{tpu_custom_call.1} parent=43 // pred_region
          %s480 = sand.u32 %s97, 1
          %s481 = scalar_lea.sflag [#allocation4], %s480
          %s482 = sand.u32 %s97, 1
          %s483 = smul.addr %s482, 480
          %s484 = scalar_lea.vmem [#allocation7], %s483
          %485 = dma.done %s481, 7680
        $region48: #{tpu_custom_call.1} parent=43 // pred_fallthru
          _
      $region44: #{tpu_custom_call.1} parent=5 // pred_fallthru
        _
    $region6: #{tpu_custom_call.1} parent=1 // loop_footer
      %s19 = sadd.s32 1, %s15
    $region7: #{tpu_custom_call.1} parent=1 // loop_footer_branch
      %14 = sbr.rel target = $region3
    $region8: #{tpu_custom_call.1} parent=1 // loop_exit
      _
    %486 = vsyncpa [#allocation3], 1
    %s487 = scalar_lea.sflag [#allocation3], 1
    %488 = vsyncpa %s487, 1
    %489 = vsyncpa [#allocation6], 1
    %490 = vsyncpa [#allocation4], 1
    %s491 = scalar_lea.sflag [#allocation4], 1
    %492 = vsyncpa %s491, 1

// kernel: tpu_custom_call.1
$region0: #{tpu_custom_call.1}
  #allocation0 [shape = 'u32[]', space=smem, size = 0x4, offset = 0x4, fixed_abs, tag = 'smem constant byte address 0x4 - core index']
  #allocation1 [shape = 'u32[144,128]{1,0:T(1,128)}', space=vmem, size = 0x12000, scoped, tag = 'internal scratch']
  %s0 = inlined_call_operand.hbm [shape: f32[2,192,640], index: 0, kind: input, shape index: {}]
  %s1 = inlined_call_operand.hbm [shape: f32[192,640], index: 1, kind: input, shape index: {}]
  %s2 = inlined_call_operand.hbm [shape: f32[2,192,640], index: 2, kind: output, shape index: {}]
  %s3 = sld [smem:[#allocation0]]
  $region49: #{tpu_custom_call.1} parent=0
    _
  %s5 = ssub.s32 1, %s3
  %s6 = scalar_select 0, %s5, %s3
  $region1: #{tpu_custom_call.1} parent=0
    #allocation2 [shape = 'u8[491520]{0}', space=vmem, size = 0x78000, scoped, tag = 'input window, operand 0']
    #allocation3 [shape = 's32[2]{0}', space=sflag, size = 0x8, scoped, tag = 'scoped memory for tpu_custom_call.1']
    #allocation4 [shape = 's32[2]{0}', space=sflag, size = 0x8, scoped, tag = 'scoped memory for tpu_custom_call.1']
    #allocation5 [shape = 'u8[491520]{0}', space=vmem, size = 0x78000, scoped, tag = 'input window, operand 1']
    #allocation6 [shape = 's32[2]{0}', space=sflag, size = 0x8, scoped, tag = 'scoped memory for tpu_custom_call.1']
    #allocation7 [shape = 'u8[491520]{0}', space=vmem, size = 0x78000, scoped, tag = 'output window, operand 0']
    %7 = vsyncpa [#allocation3], 0
    %s8 = scalar_lea.sflag [#allocation3], 1
    %9 = vsyncpa %s8, 0
    %10 = vsyncpa [#allocation6], 0
    %s11 = scalar_lea.sflag [#allocation6], 1
    %12 = vsyncpa %s11, 0
    %13 = vsyncpa [#allocation4], 0
    %s14 = scalar_lea.sflag [#allocation4], 1
    %15 = vsyncpa %s14, 0
    loop: start=0, step=1, limit=6
    $region2: #{tpu_custom_call.1} parent=1 // loop_pre_header
      _
    $region3: #{tpu_custom_call.1} parent=1 // loop_header
      %s17 = sphi 0, %s21
      %p18 = scmp.ge.s32.totalorder %s17, 6
      %s24 = sphi 0, %s36
      %s25 = sphi 0, %s32
      %s26 = sphi 0, %s24
      %s27 = sphi 0, %s25
      %s28 = sphi 0, %s26
      %s29 = sphi 0, %s27
      %s41 = sphi 0, %s43
      %s44 = sphi 0, %s41
      %s45 = sphi 0, %s44
      %s61 = sphi 0, %s45
      %s67 = sphi 0, %s69
      %s70 = sphi 0, %s67
      %s71 = sphi 0, %s70
      %s87 = sphi 0, %s71
      %s95 = sphi 0, %s97
      %s98 = sphi 0, %s95
      %s99 = sphi 0, %s98
      %s115 = sphi 0, %s99
    $region4: #{tpu_custom_call.1} parent=1 // loop_header_branch
      %20 = sbr.rel (%p18) target = $region8
    $region5: #{tpu_custom_call.1} parent=1 // loop_body
      %s22 = ssub.s32 %s17, 1
      %s23 = ssub.s32 %s17, 2
      %s30 = sadd.s32 1, %s25
      %p31 = scmp.ge.s32.totalorder %s30, 2
      %s32 = scalar_select %p31, 0, %s30
      %s33 = sadd.s32 1, %s24
      %s34 = scalar_select %p31, %s33, %s24
      %p35 = scmp.ge.s32.totalorder %s34, 2
      %s36 = scalar_select %p35, 0, %s34
      %s37 = ssub.s32 %s25, %s32
      %s38 = ssub.s32 %s24, %s36
      %s39 = sor.u32 %s37, %s38
      %p40 = scmp.eq.s32.totalorder %s39, 0
      %s42 = sadd.s32 %s41, 1
      %s43 = scalar_select %p40, %s41, %s42
      %p46 = pneg %p40
      %p47 = scmp.eq.s32.totalorder %s17, 3
      %p48 = por %p46, %p47
      %p49 = scmp.ne.s32.totalorder %s41, %s44
      %p50 = scmp.eq.s32.totalorder %s17, 0
      %p51 = por %p49, %p50
      %p52 = scmp.ne.s32.totalorder %s41, %s44
      %p53 = scmp.eq.s32.totalorder %s22, 3
      %p54 = por %p52, %p53
      %p55 = scmp.ne.s32.totalorder %s44, %s45
      %p56 = scmp.eq.s32.totalorder %s22, 0
      %p57 = por %p55, %p56
      %p58 = scmp.ne.s32.totalorder %s44, %s45
      %p59 = scmp.eq.s32.totalorder %s23, 3
      %p60 = por %p58, %p59
      %p62 = scmp.ne.s32.totalorder %s45, %s61
      %p63 = scmp.eq.s32.totalorder %s23, 0
      %p64 = por %p62, %p63
      %s65 = ssub.s32 %s24, %s36
      %p66 = scmp.eq.s32.totalorder %s65, 0
      %s68 = sadd.s32 %s67, 1
      %s69 = scalar_select %p66, %s67, %s68
      %p72 = pneg %p66
      %p73 = scmp.eq.s32.totalorder %s17, 3
      %p74 = por %p72, %p73
      %p75 = scmp.ne.s32.totalorder %s67, %s70
      %p76 = scmp.eq.s32.totalorder %s17, 0
      %p77 = por %p75, %p76
      %p78 = scmp.ne.s32.totalorder %s67, %s70
      %p79 = scmp.eq.s32.totalorder %s22, 3
      %p80 = por %p78, %p79
      %p81 = scmp.ne.s32.totalorder %s70, %s71
      %p82 = scmp.eq.s32.totalorder %s22, 0
      %p83 = por %p81, %p82
      %p84 = scmp.ne.s32.totalorder %s70, %s71
      %p85 = scmp.eq.s32.totalorder %s23, 3
      %p86 = por %p84, %p85
      %p88 = scmp.ne.s32.totalorder %s71, %s87
      %p89 = scmp.eq.s32.totalorder %s23, 0
      %p90 = por %p88, %p89
      %s91 = ssub.s32 %s25, %s32
      %s92 = ssub.s32 %s24, %s36
      %s93 = sor.u32 %s91, %s92
      %p94 = scmp.eq.s32.totalorder %s93, 0
      %s96 = sadd.s32 %s95, 1
      %s97 = scalar_select %p94, %s95, %s96
      %p100 = pneg %p94
      %p101 = scmp.eq.s32.totalorder %s17, 3
      %p102 = por %p100, %p101
      %p103 = scmp.ne.s32.totalorder %s95, %s98
      %p104 = scmp.eq.s32.totalorder %s17, 0
      %p105 = por %p103, %p104
      %p106 = scmp.ne.s32.totalorder %s95, %s98
      %p107 = scmp.eq.s32.totalorder %s22, 3
      %p108 = por %p106, %p107
      %p109 = scmp.ne.s32.totalorder %s98, %s99
      %p110 = scmp.eq.s32.totalorder %s22, 0
      %p111 = por %p109, %p110
      %p112 = scmp.ne.s32.totalorder %s98, %s99
      %p113 = scmp.eq.s32.totalorder %s23, 3
      %p114 = por %p112, %p113
      %p116 = scmp.ne.s32.totalorder %s99, %s115
      %p117 = scmp.eq.s32.totalorder %s23, 0
      %p118 = por %p116, %p117
      %p119 = scmp.le.s32.totalorder 1, %s17
      %p120 = scmp.lt.s32.totalorder %s17, 5
      %p121 = pnand %p119, %p120
      %p122 = pneg %p121
      // Predicated region
      $region9: #{tpu_custom_call.1} parent=5 // pred_check
        _
      $region10: #{tpu_custom_call.1} parent=5 // pred_check_branch
        %124 = sbr.rel (%p121) target = $region12
      $region11: #{tpu_custom_call.1} parent=5 // pred_region
        %s125 = ssub.s32 %s17, 1
      $region12: #{tpu_custom_call.1} parent=5 // pred_fallthru
        _
      %p126 = scmp.lt.s32.totalorder %s17, 4
      // Predicated region
      $region13: #{tpu_custom_call.1} parent=5 // pred_check
        %p127 = pneg %p126
      $region14: #{tpu_custom_call.1} parent=5 // pred_check_branch
        %129 = sbr.rel (%p127) target = $region16
      $region15: #{tpu_custom_call.1} parent=5 // pred_region
        // Predicated region
        $region17: #{tpu_custom_call.1} parent=15 // pred_check
          %p130 = pneg %p51
        $region18: #{tpu_custom_call.1} parent=15 // pred_check_branch
          %132 = sbr.rel (%p130) target = $region20
        $region19: #{tpu_custom_call.1} parent=15 // pred_region
          %s133 = sand.u32 %s41, 1
          %s134 = scalar_lea.sflag [#allocation3], %s133
          %s135 = sand.u32 %s41, 1
          %s136 = smul.addr %s135, 480
          %s137 = scalar_lea.vmem [#allocation2], %s136
          %s138 = smul.u32 12, %s24
          %s140 = ssub.s32 7680, 7680
          %141 = vsyncadd %s134, %s140
          %s142 = smul.addr %s138, 5
          %s143 = smul.addr %s25, 120
          %s144 = sadd.s32 %s142, %s143
          %s145 = smul.addr %s144, 128
          %s146 = scalar_lea.hbm %s0, %s145
          %s147 = sshll.u32 %s137, 4
          %s148 = int_to_ptr.vmem [resolvable:$true] %s147
          %153 = dma.hbm_to_vmem [thread:$0]  %s146, 7680, %s148, %s134, 640, 640, 40
        $region20: #{tpu_custom_call.1} parent=15 // pred_fallthru
          _
        // Predicated region
        $region21: #{tpu_custom_call.1} parent=15 // pred_check
          %p154 = pneg %p77
        $region22: #{tpu_custom_call.1} parent=15 // pred_check_branch
          %156 = sbr.rel (%p154) target = $region24
        $region23: #{tpu_custom_call.1} parent=15 // pred_region
          %s157 = sand.u32 %s67, 1
          %s158 = scalar_lea.sflag [#allocation6], %s157
          %s159 = sand.u32 %s67, 1
          %s160 = smul.addr %s159, 480
          %s161 = scalar_lea.vmem [#allocation5], %s160
          %s162 = smul.u32 12, %s24
          %s164 = ssub.s32 7680, 7680
          %165 = vsyncadd %s158, %s164
          %s166 = smul.addr %s162, 5
          %s167 = smul.addr %s166, 128
          %s168 = scalar_lea.hbm %s1, %s167
          %s169 = sshll.u32 %s161, 4
          %s170 = int_to_ptr.vmem [resolvable:$true] %s169
          %175 = dma.hbm_to_vmem [thread:$0]  %s168, 7680, %s170, %s158, 640, 640, 40
        $region24: #{tpu_custom_call.1} parent=15 // pred_fallthru
          _
      $region16: #{tpu_custom_call.1} parent=5 // pred_fallthru
        _
      %p176 = scmp.le.s32.totalorder 1, %s17
      %p177 = scmp.lt.s32.totalorder %s17, 5
      %p178 = pnand %p176, %p177
      %p179 = pneg %p178
      // Predicated region
      $region25: #{tpu_custom_call.1} parent=5 // pred_check
        _
      $region26: #{tpu_custom_call.1} parent=5 // pred_check_branch
        %181 = sbr.rel (%p178) target = $region28
      $region27: #{tpu_custom_call.1} parent=5 // pred_region
        %s182 = ssub.s32 %s17, 1
        %s183 = sand.u32 %s44, 1
        %s184 = scalar_lea.sflag [#allocation3], %s183
        %s185 = sand.u32 %s44, 1
        %s186 = smul.addr %s185, 480
        %s187 = scalar_lea.vmem [#allocation2], %s186
        // Predicated region
        $region29: #{tpu_custom_call.1} parent=27 // pred_check
          %p188 = pneg %p57
        $region30: #{tpu_custom_call.1} parent=27 // pred_check_branch
          %190 = sbr.rel (%p188) target = $region32
        $region31: #{tpu_custom_call.1} parent=27 // pred_region
          %191 = dma.done %s184, 7680
        $region32: #{tpu_custom_call.1} parent=27 // pred_fallthru
          _
        %s192 = sand.u32 %s70, 1
        %s193 = scalar_lea.sflag [#allocation6], %s192
        %s194 = sand.u32 %s70, 1
        %s195 = smul.addr %s194, 480
        %s196 = scalar_lea.vmem [#allocation5], %s195
        // Predicated region
        $region33: #{tpu_custom_call.1} parent=27 // pred_check
          %p197 = pneg %p83
        $region34: #{tpu_custom_call.1} parent=27 // pred_check_branch
          %199 = sbr.rel (%p197) target = $region36
        $region35: #{tpu_custom_call.1} parent=27 // pred_region
          %200 = dma.done %s193, 7680
        $region36: #{tpu_custom_call.1} parent=27 // pred_fallthru
          _
        %s201 = sand.u32 %s44, 1
        %s202 = scalar_lea.sflag [#allocation3], %s201
        %s203 = sand.u32 %s44, 1
        %s204 = smul.addr %s203, 480
        %s205 = scalar_lea.vmem [#allocation2], %s204
        %p206 = pneg %p57
        %p207 = pneg %p54
        %s208 = sand.u32 %s70, 1
        %s209 = scalar_lea.sflag [#allocation6], %s208
        %s210 = sand.u32 %s70, 1
        %s211 = smul.addr %s210, 480
        %s212 = scalar_lea.vmem [#allocation5], %s211
        %p213 = pneg %p83
        %p214 = pneg %p80
        %p215 = pneg %p111
        %p216 = pneg %p108
        %s217 = sand.u32 %s98, 1
        %s218 = scalar_lea.sflag [#allocation4], %s217
        %s219 = sand.u32 %s98, 1
        %s220 = smul.addr %s219, 480
        %s221 = scalar_lea.vmem [#allocation7], %s220
        %s222 = smul.u32 12, %s26
        %s223 = smul.u32 12, %s26
        %s224 = smul.u32 12, %s26
        %v225 = vld [vmem:[%s187] sm:$0xff]
        %v226 = vld [vmem:[%s187 + $0x8] sm:$0xff]
        %v227 = vld [vmem:[%s187 + $0x10] sm:$0xff]
        %v228 = vld [vmem:[%s187 + $0x18] sm:$0xff]
        %v229 = vld [vmem:[%s187 + $0x20] sm:$0xff]
        %v230 = vld [vmem:[%s187 + $0x28] sm:$0xff]
        %v231 = vld [vmem:[%s187 + $0x30] sm:$0xff]
        %v232 = vld [vmem:[%s187 + $0x38] sm:$0xff]
        %v233 = vld [vmem:[%s187 + $0x40] sm:$0xff]
        %v234 = vld [vmem:[%s187 + $0x48] sm:$0xff]
        %v235 = vld [vmem:[%s187 + $0x50] sm:$0xff]
        %v236 = vld [vmem:[%s187 + $0x58] sm:$0xff]
        %v237 = vld [vmem:[%s187 + $0x60] sm:$0xff]
        %v238 = vld [vmem:[%s187 + $0x68] sm:$0xff]
        %v239 = vld [vmem:[%s187 + $0x70] sm:$0xff]
        %v240 = vld [vmem:[%s187 + $0x78] sm:$0xff]
        %v241 = vld [vmem:[%s187 + $0x80] sm:$0xff]
        %v242 = vld [vmem:[%s187 + $0x88] sm:$0xff]
        %v243 = vld [vmem:[%s187 + $0x90] sm:$0xff]
        %v244 = vld [vmem:[%s187 + $0x98] sm:$0xff]
        %v245 = vld [vmem:[%s187 + $0xa0] sm:$0xff]
        %v246 = vld [vmem:[%s187 + $0xa8] sm:$0xff]
        %v247 = vld [vmem:[%s187 + $0xb0] sm:$0xff]
        %v248 = vld [vmem:[%s187 + $0xb8] sm:$0xff]
        %v249 = vld [vmem:[%s187 + $0xc0] sm:$0xff]
        %v250 = vld [vmem:[%s187 + $0xc8] sm:$0xff]
        %v251 = vld [vmem:[%s187 + $0xd0] sm:$0xff]
        %v252 = vld [vmem:[%s187 + $0xd8] sm:$0xff]
        %v253 = vld [vmem:[%s187 + $0xe0] sm:$0xff]
        %v254 = vld [vmem:[%s187 + $0xe8] sm:$0xff]
        %v255 = vld [vmem:[%s187 + $0xf0] sm:$0xff]
        %v256 = vld [vmem:[%s187 + $0xf8] sm:$0xff]
        %v257 = vld [vmem:[%s187 + $0x100] sm:$0xff]
        %v258 = vld [vmem:[%s187 + $0x108] sm:$0xff]
        %v259 = vld [vmem:[%s187 + $0x110] sm:$0xff]
        %v260 = vld [vmem:[%s187 + $0x118] sm:$0xff]
        %v261 = vld [vmem:[%s187 + $0x120] sm:$0xff]
        %v262 = vld [vmem:[%s187 + $0x128] sm:$0xff]
        %v263 = vld [vmem:[%s187 + $0x130] sm:$0xff]
        %v264 = vld [vmem:[%s187 + $0x138] sm:$0xff]
        %v265 = vld [vmem:[%s187 + $0x140] sm:$0xff]
        %v266 = vld [vmem:[%s187 + $0x148] sm:$0xff]
        %v267 = vld [vmem:[%s187 + $0x150] sm:$0xff]
        %v268 = vld [vmem:[%s187 + $0x158] sm:$0xff]
        %v269 = vld [vmem:[%s187 + $0x160] sm:$0xff]
        %v270 = vld [vmem:[%s187 + $0x168] sm:$0xff]
        %v271 = vld [vmem:[%s187 + $0x170] sm:$0xff]
        %v272 = vld [vmem:[%s187 + $0x178] sm:$0xff]
        %v273 = vld [vmem:[%s187 + $0x180] sm:$0xff]
        %v274 = vld [vmem:[%s187 + $0x188] sm:$0xff]
        %v275 = vld [vmem:[%s187 + $0x190] sm:$0xff]
        %v276 = vld [vmem:[%s187 + $0x198] sm:$0xff]
        %v277 = vld [vmem:[%s187 + $0x1a0] sm:$0xff]
        %v278 = vld [vmem:[%s187 + $0x1a8] sm:$0xff]
        %v279 = vld [vmem:[%s187 + $0x1b0] sm:$0xff]
        %v280 = vld [vmem:[%s187 + $0x1b8] sm:$0xff]
        %v281 = vld [vmem:[%s187 + $0x1c0] sm:$0xff]
        %v282 = vld [vmem:[%s187 + $0x1c8] sm:$0xff]
        %v283 = vld [vmem:[%s187 + $0x1d0] sm:$0xff]
        %v284 = vld [vmem:[%s187 + $0x1d8] sm:$0xff]
        %v285 = vld [vmem:[%s196] sm:$0xff]
        %v286 = vld [vmem:[%s196 + $0x8] sm:$0xff]
        %v287 = vld [vmem:[%s196 + $0x10] sm:$0xff]
        %v288 = vld [vmem:[%s196 + $0x18] sm:$0xff]
        %v289 = vld [vmem:[%s196 + $0x20] sm:$0xff]
        %v290 = vld [vmem:[%s196 + $0x28] sm:$0xff]
        %v291 = vld [vmem:[%s196 + $0x30] sm:$0xff]
        %v292 = vld [vmem:[%s196 + $0x38] sm:$0xff]
        %v293 = vld [vmem:[%s196 + $0x40] sm:$0xff]
        %v294 = vld [vmem:[%s196 + $0x48] sm:$0xff]
        %v295 = vld [vmem:[%s196 + $0x50] sm:$0xff]
        %v296 = vld [vmem:[%s196 + $0x58] sm:$0xff]
        %v297 = vld [vmem:[%s196 + $0x60] sm:$0xff]
        %v298 = vld [vmem:[%s196 + $0x68] sm:$0xff]
        %v299 = vld [vmem:[%s196 + $0x70] sm:$0xff]
        %v300 = vld [vmem:[%s196 + $0x78] sm:$0xff]
        %v301 = vld [vmem:[%s196 + $0x80] sm:$0xff]
        %v302 = vld [vmem:[%s196 + $0x88] sm:$0xff]
        %v303 = vld [vmem:[%s196 + $0x90] sm:$0xff]
        %v304 = vld [vmem:[%s196 + $0x98] sm:$0xff]
        %v305 = vld [vmem:[%s196 + $0xa0] sm:$0xff]
        %v306 = vld [vmem:[%s196 + $0xa8] sm:$0xff]
        %v307 = vld [vmem:[%s196 + $0xb0] sm:$0xff]
        %v308 = vld [vmem:[%s196 + $0xb8] sm:$0xff]
        %v309 = vld [vmem:[%s196 + $0xc0] sm:$0xff]
        %v310 = vld [vmem:[%s196 + $0xc8] sm:$0xff]
        %v311 = vld [vmem:[%s196 + $0xd0] sm:$0xff]
        %v312 = vld [vmem:[%s196 + $0xd8] sm:$0xff]
        %v313 = vld [vmem:[%s196 + $0xe0] sm:$0xff]
        %v314 = vld [vmem:[%s196 + $0xe8] sm:$0xff]
        %v315 = vld [vmem:[%s196 + $0xf0] sm:$0xff]
        %v316 = vld [vmem:[%s196 + $0xf8] sm:$0xff]
        %v317 = vld [vmem:[%s196 + $0x100] sm:$0xff]
        %v318 = vld [vmem:[%s196 + $0x108] sm:$0xff]
        %v319 = vld [vmem:[%s196 + $0x110] sm:$0xff]
        %v320 = vld [vmem:[%s196 + $0x118] sm:$0xff]
        %v321 = vld [vmem:[%s196 + $0x120] sm:$0xff]
        %v322 = vld [vmem:[%s196 + $0x128] sm:$0xff]
        %v323 = vld [vmem:[%s196 + $0x130] sm:$0xff]
        %v324 = vld [vmem:[%s196 + $0x138] sm:$0xff]
        %v325 = vld [vmem:[%s196 + $0x140] sm:$0xff]
        %v326 = vld [vmem:[%s196 + $0x148] sm:$0xff]
        %v327 = vld [vmem:[%s196 + $0x150] sm:$0xff]
        %v328 = vld [vmem:[%s196 + $0x158] sm:$0xff]
        %v329 = vld [vmem:[%s196 + $0x160] sm:$0xff]
        %v330 = vld [vmem:[%s196 + $0x168] sm:$0xff]
        %v331 = vld [vmem:[%s196 + $0x170] sm:$0xff]
        %v332 = vld [vmem:[%s196 + $0x178] sm:$0xff]
        %v333 = vld [vmem:[%s196 + $0x180] sm:$0xff]
        %v334 = vld [vmem:[%s196 + $0x188] sm:$0xff]
        %v335 = vld [vmem:[%s196 + $0x190] sm:$0xff]
        %v336 = vld [vmem:[%s196 + $0x198] sm:$0xff]
        %v337 = vld [vmem:[%s196 + $0x1a0] sm:$0xff]
        %v338 = vld [vmem:[%s196 + $0x1a8] sm:$0xff]
        %v339 = vld [vmem:[%s196 + $0x1b0] sm:$0xff]
        %v340 = vld [vmem:[%s196 + $0x1b8] sm:$0xff]
        %v341 = vld [vmem:[%s196 + $0x1c0] sm:$0xff]
        %v342 = vld [vmem:[%s196 + $0x1c8] sm:$0xff]
        %v343 = vld [vmem:[%s196 + $0x1d0] sm:$0xff]
        %v344 = vld [vmem:[%s196 + $0x1d8] sm:$0xff]
        %v345 = vadd.f32 %v225, %v285
        %v346 = vadd.f32 %v226, %v286
        %v347 = vadd.f32 %v227, %v287
        %v348 = vadd.f32 %v228, %v288
        %v349 = vadd.f32 %v229, %v289
        %v350 = vadd.f32 %v230, %v290
        %v351 = vadd.f32 %v231, %v291
        %v352 = vadd.f32 %v232, %v292
        %v353 = vadd.f32 %v233, %v293
        %v354 = vadd.f32 %v234, %v294
        %v355 = vadd.f32 %v235, %v295
        %v356 = vadd.f32 %v236, %v296
        %v357 = vadd.f32 %v237, %v297
        %v358 = vadd.f32 %v238, %v298
        %v359 = vadd.f32 %v239, %v299
        %v360 = vadd.f32 %v240, %v300
        %v361 = vadd.f32 %v241, %v301
        %v362 = vadd.f32 %v242, %v302
        %v363 = vadd.f32 %v243, %v303
        %v364 = vadd.f32 %v244, %v304
        %v365 = vadd.f32 %v245, %v305
        %v366 = vadd.f32 %v246, %v306
        %v367 = vadd.f32 %v247, %v307
        %v368 = vadd.f32 %v248, %v308
        %v369 = vadd.f32 %v249, %v309
        %v370 = vadd.f32 %v250, %v310
        %v371 = vadd.f32 %v251, %v311
        %v372 = vadd.f32 %v252, %v312
        %v373 = vadd.f32 %v253, %v313
        %v374 = vadd.f32 %v254, %v314
        %v375 = vadd.f32 %v255, %v315
        %v376 = vadd.f32 %v256, %v316
        %v377 = vadd.f32 %v257, %v317
        %v378 = vadd.f32 %v258, %v318
        %v379 = vadd.f32 %v259, %v319
        %v380 = vadd.f32 %v260, %v320
        %v381 = vadd.f32 %v261, %v321
        %v382 = vadd.f32 %v262, %v322
        %v383 = vadd.f32 %v263, %v323
        %v384 = vadd.f32 %v264, %v324
        %v385 = vadd.f32 %v265, %v325
        %v386 = vadd.f32 %v266, %v326
        %v387 = vadd.f32 %v267, %v327
        %v388 = vadd.f32 %v268, %v328
        %v389 = vadd.f32 %v269, %v329
        %v390 = vadd.f32 %v270, %v330
        %v391 = vadd.f32 %v271, %v331
        %v392 = vadd.f32 %v272, %v332
        %v393 = vadd.f32 %v273, %v333
        %v394 = vadd.f32 %v274, %v334
        %v395 = vadd.f32 %v275, %v335
        %v396 = vadd.f32 %v276, %v336
        %v397 = vadd.f32 %v277, %v337
        %v398 = vadd.f32 %v278, %v338
        %v399 = vadd.f32 %v279, %v339
        %v400 = vadd.f32 %v280, %v340
        %v401 = vadd.f32 %v281, %v341
        %v402 = vadd.f32 %v282, %v342
        %v403 = vadd.f32 %v283, %v343
        %v404 = vadd.f32 %v284, %v344
        %405 = vst [vmem:[%s221] sm:$0xff] %v345
        %406 = vst [vmem:[%s221 + $0x8] sm:$0xff] %v346
        %407 = vst [vmem:[%s221 + $0x10] sm:$0xff] %v347
        %408 = vst [vmem:[%s221 + $0x18] sm:$0xff] %v348
        %409 = vst [vmem:[%s221 + $0x20] sm:$0xff] %v349
        %410 = vst [vmem:[%s221 + $0x28] sm:$0xff] %v350
        %411 = vst [vmem:[%s221 + $0x30] sm:$0xff] %v351
        %412 = vst [vmem:[%s221 + $0x38] sm:$0xff] %v352
        %413 = vst [vmem:[%s221 + $0x40] sm:$0xff] %v353
        %414 = vst [vmem:[%s221 + $0x48] sm:$0xff] %v354
        %415 = vst [vmem:[%s221 + $0x50] sm:$0xff] %v355
        %416 = vst [vmem:[%s221 + $0x58] sm:$0xff] %v356
        %417 = vst [vmem:[%s221 + $0x60] sm:$0xff] %v357
        %418 = vst [vmem:[%s221 + $0x68] sm:$0xff] %v358
        %419 = vst [vmem:[%s221 + $0x70] sm:$0xff] %v359
        %420 = vst [vmem:[%s221 + $0x78] sm:$0xff] %v360
        %421 = vst [vmem:[%s221 + $0x80] sm:$0xff] %v361
        %422 = vst [vmem:[%s221 + $0x88] sm:$0xff] %v362
        %423 = vst [vmem:[%s221 + $0x90] sm:$0xff] %v363
        %424 = vst [vmem:[%s221 + $0x98] sm:$0xff] %v364
        %425 = vst [vmem:[%s221 + $0xa0] sm:$0xff] %v365
        %426 = vst [vmem:[%s221 + $0xa8] sm:$0xff] %v366
        %427 = vst [vmem:[%s221 + $0xb0] sm:$0xff] %v367
        %428 = vst [vmem:[%s221 + $0xb8] sm:$0xff] %v368
        %429 = vst [vmem:[%s221 + $0xc0] sm:$0xff] %v369
        %430 = vst [vmem:[%s221 + $0xc8] sm:$0xff] %v370
        %431 = vst [vmem:[%s221 + $0xd0] sm:$0xff] %v371
        %432 = vst [vmem:[%s221 + $0xd8] sm:$0xff] %v372
        %433 = vst [vmem:[%s221 + $0xe0] sm:$0xff] %v373
        %434 = vst [vmem:[%s221 + $0xe8] sm:$0xff] %v374
        %435 = vst [vmem:[%s221 + $0xf0] sm:$0xff] %v375
        %436 = vst [vmem:[%s221 + $0xf8] sm:$0xff] %v376
        %437 = vst [vmem:[%s221 + $0x100] sm:$0xff] %v377
        %438 = vst [vmem:[%s221 + $0x108] sm:$0xff] %v378
        %439 = vst [vmem:[%s221 + $0x110] sm:$0xff] %v379
        %440 = vst [vmem:[%s221 + $0x118] sm:$0xff] %v380
        %441 = vst [vmem:[%s221 + $0x120] sm:$0xff] %v381
        %442 = vst [vmem:[%s221 + $0x128] sm:$0xff] %v382
        %443 = vst [vmem:[%s221 + $0x130] sm:$0xff] %v383
        %444 = vst [vmem:[%s221 + $0x138] sm:$0xff] %v384
        %445 = vst [vmem:[%s221 + $0x140] sm:$0xff] %v385
        %446 = vst [vmem:[%s221 + $0x148] sm:$0xff] %v386
        %447 = vst [vmem:[%s221 + $0x150] sm:$0xff] %v387
        %448 = vst [vmem:[%s221 + $0x158] sm:$0xff] %v388
        %449 = vst [vmem:[%s221 + $0x160] sm:$0xff] %v389
        %450 = vst [vmem:[%s221 + $0x168] sm:$0xff] %v390
        %451 = vst [vmem:[%s221 + $0x170] sm:$0xff] %v391
        %452 = vst [vmem:[%s221 + $0x178] sm:$0xff] %v392
        %453 = vst [vmem:[%s221 + $0x180] sm:$0xff] %v393
        %454 = vst [vmem:[%s221 + $0x188] sm:$0xff] %v394
        %455 = vst [vmem:[%s221 + $0x190] sm:$0xff] %v395
        %456 = vst [vmem:[%s221 + $0x198] sm:$0xff] %v396
        %457 = vst [vmem:[%s221 + $0x1a0] sm:$0xff] %v397
        %458 = vst [vmem:[%s221 + $0x1a8] sm:$0xff] %v398
        %459 = vst [vmem:[%s221 + $0x1b0] sm:$0xff] %v399
        %460 = vst [vmem:[%s221 + $0x1b8] sm:$0xff] %v400
        %461 = vst [vmem:[%s221 + $0x1c0] sm:$0xff] %v401
        %462 = vst [vmem:[%s221 + $0x1c8] sm:$0xff] %v402
        %463 = vst [vmem:[%s221 + $0x1d0] sm:$0xff] %v403
        %464 = vst [vmem:[%s221 + $0x1d8] sm:$0xff] %v404
        %s465 = sand.u32 %s98, 1
        %s466 = scalar_lea.sflag [#allocation4], %s465
        %s467 = sand.u32 %s98, 1
        %s468 = smul.addr %s467, 480
        %s469 = scalar_lea.vmem [#allocation7], %s468
        // Predicated region
        $region37: #{tpu_custom_call.1} parent=27 // pred_check
          %p470 = pneg %p108
        $region38: #{tpu_custom_call.1} parent=27 // pred_check_branch
          %472 = sbr.rel (%p470) target = $region40
        $region39: #{tpu_custom_call.1} parent=27 // pred_region
          %s473 = smul.u32 12, %s26
          %s475 = ssub.s32 7680, 7680
          %476 = vsyncadd %s466, %s475
          %s477 = smul.addr %s473, 5
          %s478 = smul.addr %s27, 120
          %s479 = sadd.s32 %s477, %s478
          %s480 = smul.addr %s479, 128
          %s481 = scalar_lea.hbm %s2, %s480
          %s482 = sshll.u32 %s469, 4
          %s483 = int_to_ptr.vmem [resolvable:$true] %s482
          %488 = dma.vmem_to_hbm [thread:$0]  %s483, 7680, %s481, %s466, 640, 640, 40
        $region40: #{tpu_custom_call.1} parent=27 // pred_fallthru
          _
      $region28: #{tpu_custom_call.1} parent=5 // pred_fallthru
        _
      %p489 = scmp.le.s32.totalorder 2, %s17
      // Predicated region
      $region41: #{tpu_custom_call.1} parent=5 // pred_check
        %p490 = pneg %p489
      $region42: #{tpu_custom_call.1} parent=5 // pred_check_branch
        %492 = sbr.rel (%p490) target = $region44
      $region43: #{tpu_custom_call.1} parent=5 // pred_region
        %s493 = ssub.s32 %s17, 2
        // Predicated region
        $region45: #{tpu_custom_call.1} parent=43 // pred_check
          %p494 = pneg %p114
        $region46: #{tpu_custom_call.1} parent=43 // pred_check_branch
          %496 = sbr.rel (%p494) target = $region48
        $region47: #{tpu_custom_call.1} parent=43 // pred_region
          %s497 = sand.u32 %s99, 1
          %s498 = scalar_lea.sflag [#allocation4], %s497
          %s499 = sand.u32 %s99, 1
          %s500 = smul.addr %s499, 480
          %s501 = scalar_lea.vmem [#allocation7], %s500
          %502 = dma.done %s498, 7680
        $region48: #{tpu_custom_call.1} parent=43 // pred_fallthru
          _
      $region44: #{tpu_custom_call.1} parent=5 // pred_fallthru
        _
    $region6: #{tpu_custom_call.1} parent=1 // loop_footer
      %s21 = sadd.s32 1, %s17
    $region7: #{tpu_custom_call.1} parent=1 // loop_footer_branch
      %16 = sbr.rel target = $region3
    $region8: #{tpu_custom_call.1} parent=1 // loop_exit
      _
    %503 = vsyncpa [#allocation3], 1
    %s504 = scalar_lea.sflag [#allocation3], 1
    %505 = vsyncpa %s504, 1
    %506 = vsyncpa [#allocation6], 1
    %s507 = scalar_lea.sflag [#allocation6], 1
    %508 = vsyncpa %s507, 1
    %509 = vsyncpa [#allocation4], 1
    %s510 = scalar_lea.sflag [#allocation4], 1
    %511 = vsyncpa %s510, 1

</llo_original>
